<compile_context>
chip_gen: v7x
topology: tpu7x:2x2x1
jax: 0.10.0
libtpu: 0.0.40
codegen_flags: <defaults>
</compile_context>

<pallas_src>
import functools

import jax
import jax.numpy as jnp
from jax.experimental import pallas as pl
from jax.experimental.pallas import tpu as pltpu

_LANE = 128
_SUBLANE_BF16 = 16                       # bf16 packs 16 sublanes per vreg
_VMEM_BUDGET_BYTES = 40 * 1024 * 1024    # resident budget: safe on v7x 64 MiB/TC
_VMEM_LIMIT_BYTES = 64 * 1024 * 1024     # raise v5e's 16 MiB default scoped limit


def _round_up(x, m):
    return (x + m - 1) // m * m


# ----------------------------------------------------------------------------
# Kernel: fused (Linear -> ReLU)^(n-1) -> Linear
# ----------------------------------------------------------------------------
def _fused_decoder_kernel(*refs, num_layers, pdims):
    """refs = (x, w_0 .. w_{n-1}, b_packed, out)."""
    x_ref = refs[0]
    b_ref = refs[1 + num_layers]              # (num_layers, max_pdout) f32
    o_ref = refs[-1]

    h = x_ref[...]                            # bf16 (TB, D0_pad)
    for i in range(num_layers):
        w = refs[1 + i][...]                  # bf16 (Di_pad, Di1_pad), resident
        pdout = pdims[i + 1]
        b = b_ref[i:i + 1, :pdout]            # f32 (1, pdout), static slice
        acc = jnp.dot(h, w, preferred_element_type=jnp.float32)   # MXU, f32 acc
        acc = acc + b                          # bias on f32 accumulator (VPU)
        if i < num_layers - 1:
            h = jnp.maximum(acc, 0.0).astype(jnp.bfloat16)         # ReLU, bf16
        else:
            o_ref[...] = acc.astype(o_ref.dtype)                   # linear out


# ----------------------------------------------------------------------------
# One-time parameter preparation (kept OUT of the per-call forward path)
# ----------------------------------------------------------------------------
def prepare_decoder_params(params):
    """Pad feature dims to multiples of 128, cast weights to bf16, pack biases."""
    n_layers = len(params)
    dims = [params[0][0].shape[0]] + [w.shape[1] for (w, _) in params]
    pdims = [_round_up(d, _LANE) for d in dims]

    padded_ws = []
    for li, (w, _) in enumerate(params):
        din, dout = w.shape
        w_p = jnp.zeros((pdims[li], pdims[li + 1]), jnp.bfloat16)
        padded_ws.append(w_p.at[:din, :dout].set(w.astype(jnp.bfloat16)))

    # All biases packed into a single f32 table -> one DMA / one VMEM buffer.
    max_pd = max(pdims[1:])
    b_pack = jnp.zeros((n_layers, max_pd), jnp.float32)
    for li, (_, b) in enumerate(params):
        b_pack = b_pack.at[li, :b.shape[0]].set(b.astype(jnp.float32))

    return tuple(dims), tuple(pdims), tuple(padded_ws), b_pack


# ----------------------------------------------------------------------------
# Forward wrapper
# ----------------------------------------------------------------------------
def _resident_vmem_bytes(tb, pdims, n_layers, out_itemsize):
    """Approximate resident VMEM footprint for a given batch tile."""
    max_hidden = max(pdims[1:])
    w_bytes = sum(pdims[i] * pdims[i + 1] for i in range(n_layers)) * 2  # bf16, 1x
    b_bytes = n_layers * max_hidden * 4
    x_bytes = 2 * tb * pdims[0] * 2                  # double-buffered input tile
    o_bytes = 2 * tb * pdims[-1] * out_itemsize      # double-buffered output tile
    tmp_bytes = tb * max_hidden * (4 + 2)            # live f32 acc + bf16 hidden
    return w_bytes + b_bytes + x_bytes + o_bytes + tmp_bytes


def _const_vmem_spec(shape):
    """Constant-index, VMEM-resident spec; single-buffered when supported."""
    idx = lambda *_: (0,) * len(shape)
    try:
        return pl.BlockSpec(shape, idx, memory_space=pltpu.MemorySpace.VMEM,
                            pipeline_mode=pl.Buffered(buffer_count=1))
    except TypeError:   # older jax without pipeline_mode: default double-buffer
        return pl.BlockSpec(shape, idx, memory_space=pltpu.MemorySpace.VMEM)


def simple_gauss_vae_fc_decoder(x, padded_weights, packed_biases, dims, pdims,
                                *, batch_tile=512, out_dtype=jnp.bfloat16):
    """y = (Linear->ReLU)^(n-1) -> Linear, computed in one Pallas kernel."""
    B, D0 = x.shape
    n_layers = len(padded_weights)
    assert D0 == dims[0]
    out_itemsize = jnp.dtype(out_dtype).itemsize

    # --- batch tile selection -------------------------------------------
    TB = min(_round_up(batch_tile, _SUBLANE_BF16), _round_up(B, _SUBLANE_BF16))
    # Keep >= 2 grid steps when batch allows it, so v7x can use both TCs.
    if _round_up(B, TB) // TB < 2 and B >= 2 * _SUBLANE_BF16:
        TB = _round_up(pl.cdiv(B, 2), _SUBLANE_BF16)
    # Shrink until the resident footprint fits the VMEM budget.
    while (TB > _SUBLANE_BF16 and
           _resident_vmem_bytes(TB, pdims, n_layers, out_itemsize)
           > _VMEM_BUDGET_BYTES):
        TB = _round_up(TB // 2, _SUBLANE_BF16)
    B_pad = _round_up(B, TB)

    # --- pad/cast activation input (cheap; skipped when already aligned) -
    if B_pad == B and pdims[0] == D0 and x.dtype == jnp.bfloat16:
        x_p = x
    else:
        x_p = jnp.zeros((B_pad, pdims[0]), jnp.bfloat16)
        x_p = x_p.at[:B, :D0].set(x.astype(jnp.bfloat16))

    # --- specs ------------------------------------------------------------
    in_specs = [pl.BlockSpec((TB, pdims[0]), lambda i: (i, 0),
                             memory_space=pltpu.MemorySpace.VMEM)]
    in_specs += [_const_vmem_spec((pdims[i], pdims[i + 1]))
                 for i in range(n_layers)]
    in_specs.append(_const_vmem_spec(packed_biases.shape))
    out_spec = pl.BlockSpec((TB, pdims[-1]), lambda i: (i, 0),
                            memory_space=pltpu.MemorySpace.VMEM)

    flops = 2 * B_pad * sum(pdims[i] * pdims[i + 1] for i in range(n_layers))
    bytes_accessed = (x_p.size * 2
                      + sum(w.size * 2 for w in padded_weights)
                      + packed_biases.size * 4
                      + B_pad * pdims[-1] * out_itemsize)

    kernel = functools.partial(_fused_decoder_kernel,
                               num_layers=n_layers, pdims=tuple(pdims))
    y_pad = pl.pallas_call(
        kernel,
        out_shape=jax.ShapeDtypeStruct((B_pad, pdims[-1]), out_dtype),
        grid=(B_pad // TB,),
        in_specs=in_specs,
        out_specs=out_spec,
        compiler_params=pltpu.CompilerParams(
            dimension_semantics=("parallel",),      # megacore sharding on v7x
            vmem_limit_bytes=_VMEM_LIMIT_BYTES),
        cost_estimate=pl.CostEstimate(flops=flops, transcendentals=0,
                                      bytes_accessed=bytes_accessed),
    )(x_p, *padded_weights, packed_biases)

    # Skip the un-pad slice when it would be a no-op (saves an HBM round-trip).
    if B_pad == B and pdims[-1] == dims[-1]:
        return y_pad
    return y_pad[:B, :dims[-1]]


def make_decoder(params, *, batch_tile=512, out_dtype=jnp.bfloat16):
    """Build a jitted forward; parameter padding happens exactly once here."""
    dims, pdims, padded_ws, packed_b = prepare_decoder_params(params)

    def _fwd(x, ws, bs):
        return simple_gauss_vae_fc_decoder(x, ws, bs, dims, pdims,
                                           batch_tile=batch_tile,
                                           out_dtype=out_dtype)
    _fwd = jax.jit(_fwd)
    return lambda x: _fwd(x, padded_ws, packed_b)


def init_decoder_params(key, layer_descriptors):
    """Deterministic parameter init (nn.Linear-style Kaiming-uniform bounds)."""
    params = []
    for (d_in, d_out) in layer_descriptors:
        key, kw, kb = jax.random.split(key, 3)
        bound = 1.0 / jnp.sqrt(jnp.float32(d_in))
        w = jax.random.uniform(kw, (d_in, d_out), jnp.float32, -bound, bound)
        b = jax.random.uniform(kb, (d_out,), jnp.float32, -bound, bound)
        params.append((w, b))
    return params


if __name__ == "__main__":
    # Small decoder: latent dim 16 -> 64 -> 256 (e.g. a flattened 16x16 image).
    layer_descriptors = [(16, 64), (64, 256)]
    batch = 32   # -> batch tile 16, 2 grid steps (exercises weight residency)

    key = jax.random.PRNGKey(0)
    key, kx = jax.random.split(key)
    x = jax.random.normal(kx, (batch, 16), dtype=jnp.float32)

    params = init_decoder_params(key, layer_descriptors)
    decoder = make_decoder(params)

    y = jax.block_until_ready(decoder(x))

    # Reference with the same bf16-operand / f32-accumulate / bf16-store policy.
    ref = x.astype(jnp.bfloat16)
    for i, (w, b) in enumerate(params):
        ref = jnp.dot(ref, w.astype(jnp.bfloat16),
                      preferred_element_type=jnp.float32) + b
        if i < len(params) - 1:
            ref = jnp.maximum(ref, 0.0).astype(jnp.bfloat16)
    ref = ref.astype(jnp.bfloat16).astype(jnp.float32)

    assert y.shape == (batch, 256), y.shape
    assert y.dtype == jnp.bfloat16, y.dtype
    err = float(jnp.max(jnp.abs(y.astype(jnp.float32) - ref)))
    assert err < 5e-2, err

    print("KERNEL_OK")
</pallas_src>

<mosaic_0001>
module attributes {stable_mosaic.version = 11 : i64} {
  func.func @_fused_decoder_kernel(%arg0: i32, %arg1: memref<16x128xbf16, #tpu.memory_space<vmem>>, %arg2: memref<128x128xbf16, #tpu.memory_space<vmem>>, %arg3: memref<128x256xbf16, #tpu.memory_space<vmem>>, %arg4: memref<2x256xf32, #tpu.memory_space<vmem>>, %arg5: memref<16x256xbf16, #tpu.memory_space<vmem>>) attributes {dimension_semantics = [#tpu.dimension_semantics<parallel>], iteration_bounds = array<i64: 2>, scalar_prefetch = 0 : i64, scratch_operands = 0 : i64, tpu.core_type = #tpu.core_type<tc>, window_params = [{transform_indices = @transform_0, window_bounds = array<i64: 16, 128>}, {pipeline_mode = #tpu.pipeline_mode<synchronous>, transform_indices = @transform_1, window_bounds = array<i64: 128, 128>}, {pipeline_mode = #tpu.pipeline_mode<synchronous>, transform_indices = @transform_2, window_bounds = array<i64: 128, 256>}, {pipeline_mode = #tpu.pipeline_mode<synchronous>, transform_indices = @transform_3, window_bounds = array<i64: 2, 256>}, {transform_indices = @transform_4, window_bounds = array<i64: 16, 256>}]} {
    %c0 = arith.constant 0 : index
    %c0_0 = arith.constant 0 : index
    %0 = vector.load %arg1[%c0, %c0_0] : memref<16x128xbf16, #tpu.memory_space<vmem>>, vector<16x128xbf16>
    %c0_1 = arith.constant 0 : index
    %c0_2 = arith.constant 0 : index
    %1 = vector.load %arg2[%c0_1, %c0_2] : memref<128x128xbf16, #tpu.memory_space<vmem>>, vector<128x128xbf16>
    %c0_3 = arith.constant 0 : index
    %c0_4 = arith.constant 0 : index
    %2 = vector.load %arg4[%c0_3, %c0_4] : memref<2x256xf32, #tpu.memory_space<vmem>>, vector<1x128xf32>
    %cst = arith.constant dense<0.000000e+00> : vector<16x128xf32>
    %3 = tpu.matmul %0, %1, %cst {dimension_numbers = #tpu.dot_dimension_numbers<[1], [0], [0], [1], [0, 0, 1, 1], [], []>} : vector<16x128xbf16>, vector<128x128xbf16>, vector<16x128xf32> -> vector<16x128xf32>
    %4 = vector.broadcast %2 : vector<1x128xf32> to vector<16x128xf32>
    %5 = arith.addf %3, %4 : vector<16x128xf32>
    %cst_5 = arith.constant 0.000000e+00 : f32
    %6 = vector.broadcast %cst_5 : f32 to vector<16x128xf32>
    %7 = arith.maximumf %5, %6 : vector<16x128xf32>
    %8 = arith.truncf %7 : vector<16x128xf32> to vector<16x128xbf16>
    %c0_6 = arith.constant 0 : index
    %c0_7 = arith.constant 0 : index
    %9 = vector.load %arg3[%c0_6, %c0_7] : memref<128x256xbf16, #tpu.memory_space<vmem>>, vector<128x256xbf16>
    %c1 = arith.constant 1 : index
    %c0_8 = arith.constant 0 : index
    %10 = vector.load %arg4[%c1, %c0_8] : memref<2x256xf32, #tpu.memory_space<vmem>>, vector<1x256xf32>
    %cst_9 = arith.constant dense<0.000000e+00> : vector<16x256xf32>
    %11 = tpu.matmul %8, %9, %cst_9 {dimension_numbers = #tpu.dot_dimension_numbers<[1], [0], [0], [1], [0, 0, 1, 1], [], []>} : vector<16x128xbf16>, vector<128x256xbf16>, vector<16x256xf32> -> vector<16x256xf32>
    %12 = vector.broadcast %10 : vector<1x256xf32> to vector<16x256xf32>
    %13 = arith.addf %11, %12 : vector<16x256xf32>
    %14 = arith.truncf %13 : vector<16x256xf32> to vector<16x256xbf16>
    %c0_10 = arith.constant 0 : index
    %c0_11 = arith.constant 0 : index
    %15 = vector.load %arg5[%c0_10, %c0_11] : memref<16x256xbf16, #tpu.memory_space<vmem>>, vector<16x256xbf16>
    tpu.vector_store %arg5[%c0_10, %c0_11], %14 {strides = array<i32>} : memref<16x256xbf16, #tpu.memory_space<vmem>>, vector<16x256xbf16>,
    return
  }
  func.func @transform_0(%arg0: i32) -> (i32, i32) {
    %c0_i32 = arith.constant 0 : i32
    %c0_i32_0 = arith.constant 0 : i32
    return %arg0, %c0_i32 : i32, i32
  }
  func.func @transform_1(%arg0: i32) -> (i32, i32) {
    %c0_i32 = arith.constant 0 : i32
    %c0_i32_0 = arith.constant 0 : i32
    %c0_i32_1 = arith.constant 0 : i32
    return %c0_i32, %c0_i32_0 : i32, i32
  }
  func.func @transform_2(%arg0: i32) -> (i32, i32) {
    %c0_i32 = arith.constant 0 : i32
    %c0_i32_0 = arith.constant 0 : i32
    %c0_i32_1 = arith.constant 0 : i32
    return %c0_i32, %c0_i32_0 : i32, i32
  }
  func.func @transform_3(%arg0: i32) -> (i32, i32) {
    %c0_i32 = arith.constant 0 : i32
    %c0_i32_0 = arith.constant 0 : i32
    %c0_i32_1 = arith.constant 0 : i32
    return %c0_i32, %c0_i32_0 : i32, i32
  }
  func.func @transform_4(%arg0: i32) -> (i32, i32) {
    %c0_i32 = arith.constant 0 : i32
    %c0_i32_0 = arith.constant 0 : i32
    return %arg0, %c0_i32 : i32, i32
  }
}

</mosaic_0001>

<llo_original>
// kernel: _fwd.1
$region0: #{_fwd.1}
  #allocation0 [shape = 'u32[]', space=smem, size = 0x4, offset = 0x4, fixed_abs, tag = 'smem constant byte address 0x4 - core index']
  #allocation1 [shape = 'u32[144,128]{1,0:T(1,128)}', space=vmem, size = 0x12000, scoped, tag = 'internal scratch']
  %s0 = inlined_call_operand.hbm [shape: bf16[32,128], index: 0, kind: input, shape index: {}]
  %s1 = inlined_call_operand.hbm [shape: bf16[128,128], index: 1, kind: input, shape index: {}]
  %s2 = inlined_call_operand.hbm [shape: bf16[128,256], index: 2, kind: input, shape index: {}]
  %s3 = inlined_call_operand.hbm [shape: f32[2,256], index: 3, kind: input, shape index: {}]
  %s4 = inlined_call_operand.hbm [shape: bf16[32,256], index: 4, kind: output, shape index: {}]
  %s5 = sld [smem:[#allocation0]]
  $region65: #{_fwd.1} parent=0
    _
  %s7 = ssub.s32 1, %s5
  %s8 = scalar_select 0, %s7, %s5
  $region1: #{_fwd.1} parent=0
    #allocation2 [shape = 'u8[8192]{0}', space=vmem, size = 0x2000, scoped, tag = 'input window, operand 0']
    #allocation3 [shape = 's32[2]{0}', space=sflag, size = 0x8, scoped, tag = 'scoped memory for _fwd.1']
    #allocation4 [shape = 's32[2]{0}', space=sflag, size = 0x8, scoped, tag = 'scoped memory for _fwd.1']
    #allocation5 [shape = 'u8[32768]{0}', space=vmem, size = 0x8000, scoped, tag = 'input window, operand 1, single buffered']
    #allocation6 [shape = 's32[1]{0}', space=sflag, size = 0x4, scoped, tag = 'scoped memory for _fwd.1']
    #allocation7 [shape = 'u8[65536]{0}', space=vmem, size = 0x10000, scoped, tag = 'input window, operand 2, single buffered']
    #allocation8 [shape = 'u8[2048]{0}', space=vmem, size = 0x800, scoped, tag = 'input window, operand 3, single buffered']
    #allocation9 [shape = 's32[1]{0}', space=sflag, size = 0x4, scoped, tag = 'scoped memory for _fwd.1']
    #allocation10 [shape = 'u8[16384]{0}', space=vmem, size = 0x4000, scoped, tag = 'output window, operand 0']
    %9 = vsyncpa [#allocation3], 0
    %s10 = scalar_lea.sflag [#allocation3], 1
    %11 = vsyncpa %s10, 0
    %12 = vsyncpa [#allocation6], 0
    %13 = vsyncpa [#allocation9], 0
    %14 = vsyncpa [#allocation4], 0
    %s15 = scalar_lea.sflag [#allocation4], 1
    %16 = vsyncpa %s15, 0
    loop: start=0, step=1, limit=4
    $region2: #{_fwd.1} parent=1 // loop_pre_header
      _
    $region3: #{_fwd.1} parent=1 // loop_header
      %s18 = sphi 0, %s22
      %p19 = scmp.ge.s32.totalorder %s18, 4
      %s28 = sphi 0, %s30
      %s31 = sphi 0, %s28
      %s32 = sphi 0, %s31
      %s48 = sphi 0, %s32
      %s52 = sphi 0, %s52
      %s54 = sphi 0, %s52
      %s55 = sphi 0, %s54
      %s69 = sphi 0, %s55
      %s73 = sphi 0, %s73
      %s75 = sphi 0, %s73
      %s76 = sphi 0, %s75
      %s90 = sphi 0, %s76
      %s94 = sphi 0, %s94
      %s96 = sphi 0, %s94
      %s97 = sphi 0, %s96
      %s111 = sphi 0, %s97
      %s117 = sphi 0, %s119
      %s120 = sphi 0, %s117
      %s121 = sphi 0, %s120
      %s137 = sphi 0, %s121
    $region4: #{_fwd.1} parent=1 // loop_header_branch
      %21 = sbr.rel (%p19) target = $region8
    $region5: #{_fwd.1} parent=1 // loop_body
      %s23 = ssub.s32 %s18, 1
      %s24 = ssub.s32 %s18, 2
      %s25 = sadd.s32 %s18, 1
      %s26 = ssub.s32 %s18, %s25
      %p27 = scmp.eq.s32.totalorder %s26, 0
      %s29 = sadd.s32 %s28, 1
      %s30 = scalar_select %p27, %s28, %s29
      %p33 = pneg %p27
      %p34 = scmp.eq.s32.totalorder %s18, 1
      %p35 = por %p33, %p34
      %p36 = scmp.ne.s32.totalorder %s28, %s31
      %p37 = scmp.eq.s32.totalorder %s18, 0
      %p38 = por %p36, %p37
      %p39 = scmp.ne.s32.totalorder %s28, %s31
      %p40 = scmp.eq.s32.totalorder %s23, 1
      %p41 = por %p39, %p40
      %p42 = scmp.ne.s32.totalorder %s31, %s32
      %p43 = scmp.eq.s32.totalorder %s23, 0
      %p44 = por %p42, %p43
      %p45 = scmp.ne.s32.totalorder %s31, %s32
      %p46 = scmp.eq.s32.totalorder %s24, 1
      %p47 = por %p45, %p46
      %p49 = scmp.ne.s32.totalorder %s32, %s48
      %p50 = scmp.eq.s32.totalorder %s24, 0
      %p51 = por %p49, %p50
      %s53 = sadd.s32 %s52, 1
      %p56 = scmp.eq.s32.totalorder %s18, 1
      %p57 = scmp.ne.s32.totalorder %s52, %s54
      %p58 = scmp.eq.s32.totalorder %s18, 0
      %p59 = por %p57, %p58
      %p60 = scmp.ne.s32.totalorder %s52, %s54
      %p61 = scmp.eq.s32.totalorder %s23, 1
      %p62 = por %p60, %p61
      %p63 = scmp.ne.s32.totalorder %s54, %s55
      %p64 = scmp.eq.s32.totalorder %s23, 0
      %p65 = por %p63, %p64
      %p66 = scmp.ne.s32.totalorder %s54, %s55
      %p67 = scmp.eq.s32.totalorder %s24, 1
      %p68 = por %p66, %p67
      %p70 = scmp.ne.s32.totalorder %s55, %s69
      %p71 = scmp.eq.s32.totalorder %s24, 0
      %p72 = por %p70, %p71
      %s74 = sadd.s32 %s73, 1
      %p77 = scmp.eq.s32.totalorder %s18, 1
      %p78 = scmp.ne.s32.totalorder %s73, %s75
      %p79 = scmp.eq.s32.totalorder %s18, 0
      %p80 = por %p78, %p79
      %p81 = scmp.ne.s32.totalorder %s73, %s75
      %p82 = scmp.eq.s32.totalorder %s23, 1
      %p83 = por %p81, %p82
      %p84 = scmp.ne.s32.totalorder %s75, %s76
      %p85 = scmp.eq.s32.totalorder %s23, 0
      %p86 = por %p84, %p85
      %p87 = scmp.ne.s32.totalorder %s75, %s76
      %p88 = scmp.eq.s32.totalorder %s24, 1
      %p89 = por %p87, %p88
      %p91 = scmp.ne.s32.totalorder %s76, %s90
      %p92 = scmp.eq.s32.totalorder %s24, 0
      %p93 = por %p91, %p92
      %s95 = sadd.s32 %s94, 1
      %p98 = scmp.eq.s32.totalorder %s18, 1
      %p99 = scmp.ne.s32.totalorder %s94, %s96
      %p100 = scmp.eq.s32.totalorder %s18, 0
      %p101 = por %p99, %p100
      %p102 = scmp.ne.s32.totalorder %s94, %s96
      %p103 = scmp.eq.s32.totalorder %s23, 1
      %p104 = por %p102, %p103
      %p105 = scmp.ne.s32.totalorder %s96, %s97
      %p106 = scmp.eq.s32.totalorder %s23, 0
      %p107 = por %p105, %p106
      %p108 = scmp.ne.s32.totalorder %s96, %s97
      %p109 = scmp.eq.s32.totalorder %s24, 1
      %p110 = por %p108, %p109
      %p112 = scmp.ne.s32.totalorder %s97, %s111
      %p113 = scmp.eq.s32.totalorder %s24, 0
      %p114 = por %p112, %p113
      %s115 = ssub.s32 %s18, %s25
      %p116 = scmp.eq.s32.totalorder %s115, 0
      %s118 = sadd.s32 %s117, 1
      %s119 = scalar_select %p116, %s117, %s118
      %p122 = pneg %p116
      %p123 = scmp.eq.s32.totalorder %s18, 1
      %p124 = por %p122, %p123
      %p125 = scmp.ne.s32.totalorder %s117, %s120
      %p126 = scmp.eq.s32.totalorder %s18, 0
      %p127 = por %p125, %p126
      %p128 = scmp.ne.s32.totalorder %s117, %s120
      %p129 = scmp.eq.s32.totalorder %s23, 1
      %p130 = por %p128, %p129
      %p131 = scmp.ne.s32.totalorder %s120, %s121
      %p132 = scmp.eq.s32.totalorder %s23, 0
      %p133 = por %p131, %p132
      %p134 = scmp.ne.s32.totalorder %s120, %s121
      %p135 = scmp.eq.s32.totalorder %s24, 1
      %p136 = por %p134, %p135
      %p138 = scmp.ne.s32.totalorder %s121, %s137
      %p139 = scmp.eq.s32.totalorder %s24, 0
      %p140 = por %p138, %p139
      %p141 = scmp.le.s32.totalorder 1, %s18
      %p142 = scmp.lt.s32.totalorder %s18, 3
      %p143 = pnand %p141, %p142
      %p144 = pneg %p143
      // Predicated region
      $region9: #{_fwd.1} parent=5 // pred_check
        _
      $region10: #{_fwd.1} parent=5 // pred_check_branch
        %146 = sbr.rel (%p143) target = $region12
      $region11: #{_fwd.1} parent=5 // pred_region
        %s147 = ssub.s32 %s18, 1
        // Predicated region
        $region13: #{_fwd.1} parent=11 // pred_check
          %p148 = pneg %p65
        $region14: #{_fwd.1} parent=11 // pred_check_branch
          %150 = sbr.rel (%p148) target = $region16
        $region15: #{_fwd.1} parent=11 // pred_region
          %s152 = ssub.s32 1024, 1024
          %153 = vsyncadd [#allocation6], %s152
          %s154 = sshll.u32 [#allocation5], 4
          %s155 = int_to_ptr.vmem [resolvable:$true] %s154
          %160 = dma.hbm_to_vmem [thread:$0]  %s1, 1024, %s155, [#allocation6], 64, 64, 4
        $region16: #{_fwd.1} parent=11 // pred_fallthru
          _
        // Predicated region
        $region17: #{_fwd.1} parent=11 // pred_check
          %p161 = pneg %p86
        $region18: #{_fwd.1} parent=11 // pred_check_branch
          %163 = sbr.rel (%p161) target = $region20
        $region19: #{_fwd.1} parent=11 // pred_region
          %s165 = ssub.s32 2048, 2048
          %166 = vsyncadd [#allocation6], %s165
          %s167 = sshll.u32 [#allocation7], 4
          %s168 = int_to_ptr.vmem [resolvable:$true] %s167
          %173 = dma.hbm_to_vmem [thread:$0]  %s2, 2048, %s168, [#allocation6], 128, 128, 8
        $region20: #{_fwd.1} parent=11 // pred_fallthru
          _
        // Predicated region
        $region21: #{_fwd.1} parent=11 // pred_check
          %p174 = pneg %p107
        $region22: #{_fwd.1} parent=11 // pred_check_branch
          %176 = sbr.rel (%p174) target = $region24
        $region23: #{_fwd.1} parent=11 // pred_region
          %s178 = ssub.s32 64, 64
          %179 = vsyncadd [#allocation9], %s178
          %s181 = sshll.u32 [#allocation8], 4
          %s182 = int_to_ptr.vmem [resolvable:$true] %s181
          %184 = dma.hbm_to_vmem [thread:$0]  %s3, 64, %s182, [#allocation9]
        $region24: #{_fwd.1} parent=11 // pred_fallthru
          _
      $region12: #{_fwd.1} parent=5 // pred_fallthru
        _
      %p185 = scmp.lt.s32.totalorder %s18, 2
      // Predicated region
      $region25: #{_fwd.1} parent=5 // pred_check
        %p186 = pneg %p185
      $region26: #{_fwd.1} parent=5 // pred_check_branch
        %188 = sbr.rel (%p186) target = $region28
      $region27: #{_fwd.1} parent=5 // pred_region
        // Predicated region
        $region29: #{_fwd.1} parent=27 // pred_check
          %p189 = pneg %p38
        $region30: #{_fwd.1} parent=27 // pred_check_branch
          %191 = sbr.rel (%p189) target = $region32
        $region31: #{_fwd.1} parent=27 // pred_region
          %s192 = sand.u32 %s28, 1
          %s193 = scalar_lea.sflag [#allocation3], %s192
          %s194 = sand.u32 %s28, 1
          %s195 = smul.addr %s194, 8
          %s196 = scalar_lea.vmem [#allocation2], %s195
          %s197 = smul.u32 2, %s18
          %s199 = ssub.s32 128, 128
          %200 = vsyncadd %s193, %s199
          %s201 = smul.addr %s197, 64
          %s202 = scalar_lea.hbm %s0, %s201
          %s203 = sshll.u32 %s196, 4
          %s204 = int_to_ptr.vmem [resolvable:$true] %s203
          %209 = dma.hbm_to_vmem [thread:$0]  %s202, 128, %s204, %s193, 64, 64, 4
        $region32: #{_fwd.1} parent=27 // pred_fallthru
          _
      $region28: #{_fwd.1} parent=5 // pred_fallthru
        _
      %p210 = scmp.le.s32.totalorder 1, %s18
      %p211 = scmp.lt.s32.totalorder %s18, 3
      %p212 = pnand %p210, %p211
      %p213 = pneg %p212
      // Predicated region
      $region33: #{_fwd.1} parent=5 // pred_check
        _
      $region34: #{_fwd.1} parent=5 // pred_check_branch
        %215 = sbr.rel (%p212) target = $region36
      $region35: #{_fwd.1} parent=5 // pred_region
        %s216 = ssub.s32 %s18, 1
        %s217 = sand.u32 %s31, 1
        %s218 = scalar_lea.sflag [#allocation3], %s217
        %s219 = sand.u32 %s31, 1
        %s220 = smul.addr %s219, 8
        %s221 = scalar_lea.vmem [#allocation2], %s220
        // Predicated region
        $region37: #{_fwd.1} parent=35 // pred_check
          %p222 = pneg %p44
        $region38: #{_fwd.1} parent=35 // pred_check_branch
          %224 = sbr.rel (%p222) target = $region40
        $region39: #{_fwd.1} parent=35 // pred_region
          %225 = dma.done %s218, 128
        $region40: #{_fwd.1} parent=35 // pred_fallthru
          _
        // Predicated region
        $region41: #{_fwd.1} parent=35 // pred_check
          %p226 = pneg %p65
        $region42: #{_fwd.1} parent=35 // pred_check_branch
          %228 = sbr.rel (%p226) target = $region44
        $region43: #{_fwd.1} parent=35 // pred_region
          %229 = dma.done [#allocation6], 1024
        $region44: #{_fwd.1} parent=35 // pred_fallthru
          _
        // Predicated region
        $region45: #{_fwd.1} parent=35 // pred_check
          %p230 = pneg %p86
        $region46: #{_fwd.1} parent=35 // pred_check_branch
          %232 = sbr.rel (%p230) target = $region48
        $region47: #{_fwd.1} parent=35 // pred_region
          %233 = dma.done [#allocation6], 2048
        $region48: #{_fwd.1} parent=35 // pred_fallthru
          _
        // Predicated region
        $region49: #{_fwd.1} parent=35 // pred_check
          %p234 = pneg %p107
        $region50: #{_fwd.1} parent=35 // pred_check_branch
          %236 = sbr.rel (%p234) target = $region52
        $region51: #{_fwd.1} parent=35 // pred_region
          %237 = dma.done [#allocation9], 64
        $region52: #{_fwd.1} parent=35 // pred_fallthru
          _
        %s238 = sand.u32 %s31, 1
        %s239 = scalar_lea.sflag [#allocation3], %s238
        %s240 = sand.u32 %s31, 1
        %s241 = smul.addr %s240, 8
        %s242 = scalar_lea.vmem [#allocation2], %s241
        %p243 = pneg %p44
        %p244 = pneg %p41
        %p245 = pneg %p65
        %p246 = pneg %p62
        %p247 = pneg %p86
        %p248 = pneg %p83
        %p249 = pneg %p107
        %p250 = pneg %p104
        %p251 = pneg %p133
        %p252 = pneg %p130
        %s253 = sand.u32 %s120, 1
        %s254 = scalar_lea.sflag [#allocation4], %s253
        %s255 = sand.u32 %s120, 1
        %s256 = smul.addr %s255, 16
        %s257 = scalar_lea.vmem [#allocation10], %s256
        %s258 = smul.u32 2, %s23
        %s259 = smul.u32 2, %s23
        %v261 = vld [vmem:[%s221] sm:$0xf]
        %v262 = vld [vmem:[%s221 + $0x4] sm:$0xf]
        %v263 = vld [vmem:[#allocation5] sm:$0xf]
        %v264 = vld [vmem:[#allocation5 + $0x4] sm:$0xf]
        %v265 = vld [vmem:[#allocation5 + $0x8] sm:$0xf]
        %v266 = vld [vmem:[#allocation5 + $0xc] sm:$0xf]
        %v267 = vld [vmem:[#allocation5 + $0x10] sm:$0xf]
        %v268 = vld [vmem:[#allocation5 + $0x14] sm:$0xf]
        %v269 = vld [vmem:[#allocation5 + $0x18] sm:$0xf]
        %v270 = vld [vmem:[#allocation5 + $0x1c] sm:$0xf]
        %v271 = vld [vmem:[#allocation5 + $0x20] sm:$0xf]
        %v272 = vld [vmem:[#allocation5 + $0x24] sm:$0xf]
        %v273 = vld [vmem:[#allocation5 + $0x28] sm:$0xf]
        %v274 = vld [vmem:[#allocation5 + $0x2c] sm:$0xf]
        %v275 = vld [vmem:[#allocation5 + $0x30] sm:$0xf]
        %v276 = vld [vmem:[#allocation5 + $0x34] sm:$0xf]
        %v277 = vld [vmem:[#allocation5 + $0x38] sm:$0xf]
        %v278 = vld [vmem:[#allocation5 + $0x3c] sm:$0xf]
        %v279 = vld [vmem:[#allocation8] sm:$0x1]
        %v280 = vlaneseq
        %v281 = vshrl.u32 %v280, 7
        %v282 = vsub.s32 0, %v281
        %v283 = vrot.slane %v279, %v282
        %v286 = vunpack.c.l.b16 %v261
        %v287 = vunpack.c.l.b16 %v262
        %v288 = vpack.c.b16 %v287, %v286
        %v306 = vunpack.c.l.b16 %v263
        %v307 = vunpack.c.l.b16 %v264
        %v308 = vunpack.c.l.b16 %v265
        %v309 = vunpack.c.l.b16 %v266
        %v310 = vunpack.c.l.b16 %v267
        %v311 = vunpack.c.l.b16 %v268
        %v312 = vunpack.c.l.b16 %v269
        %v313 = vunpack.c.l.b16 %v270
        %v314 = vunpack.c.l.b16 %v271
        %v315 = vunpack.c.l.b16 %v272
        %v316 = vunpack.c.l.b16 %v273
        %v317 = vunpack.c.l.b16 %v274
        %v318 = vunpack.c.l.b16 %v275
        %v319 = vunpack.c.l.b16 %v276
        %v320 = vunpack.c.l.b16 %v277
        %v321 = vunpack.c.l.b16 %v278
        %v322 = vpack.c.b16 %v307, %v306
        %v323 = vpack.c.b16 %v309, %v308
        %v324 = vpack.c.b16 %v311, %v310
        %v325 = vpack.c.b16 %v313, %v312
        %v326 = vpack.c.b16 %v315, %v314
        %v327 = vpack.c.b16 %v317, %v316
        %v328 = vpack.c.b16 %v319, %v318
        %v329 = vpack.c.b16 %v321, %v320
        %338 = vmatprep.subr.bf16.mxu0 0
        %339 = vmatpush1.bf16.msra.mxu0 %v322
        %340 = vmatprep.subr.bf16.mxu0 0
        %341 = vmatpush1.bf16.msra.mxu0 %v323
        %342 = vmatprep.subr.bf16.mxu0 0
        %343 = vmatpush1.bf16.msra.mxu0 %v324
        %344 = vmatprep.subr.bf16.mxu0 0
        %345 = vmatpush1.bf16.msra.mxu0 %v325
        %346 = vmatprep.subr.bf16.mxu0 0
        %347 = vmatpush1.bf16.msra.mxu0 %v326
        %348 = vmatprep.subr.bf16.mxu0 0
        %349 = vmatpush1.bf16.msra.mxu0 %v327
        %350 = vmatprep.subr.bf16.mxu0 0
        %351 = vmatpush1.bf16.msra.mxu0 %v328
        %352 = vmatprep.subr.bf16.mxu0 0
        %353 = vmatpush1.bf16.msra.mxu0 %v329
        %354 = vmatprep.subr.bf16.mxu0 0
        %355 = vmatpush1.bf16.msra.mxu0 0
        %356 = vmatprep.subr.bf16.mxu0 0
        %357 = vmatpush1.bf16.msra.mxu0 0
        %358 = vmatprep.subr.bf16.mxu0 0
        %359 = vmatpush1.bf16.msra.mxu0 0
        %360 = vmatprep.subr.bf16.mxu0 0
        %361 = vmatpush1.bf16.msra.mxu0 0
        %362 = vmatprep.subr.bf16.mxu0 0
        %363 = vmatpush1.bf16.msra.mxu0 0
        %364 = vmatprep.subr.bf16.mxu0 0
        %365 = vmatpush1.bf16.msra.mxu0 0
        %366 = vmatprep.subr.bf16.mxu0 0
        %367 = vmatpush1.bf16.msra.mxu0 0
        %368 = vmatprep.subr.bf16.mxu0 0
        %369 = vmatpush1.bf16.msra.mxu0 0
        %370 = vmatprep.mubr.bf16.mxu0 0
        %371 = vmatmul.mubr.bf16.gmra.mrb[0].mxu0 %v288
        %v372 = vpop.f32.mrb[0].mxu0
        %v373 = vadd.f32 %v283, %v372
        %v374 = vpop.f32.mrb[0].mxu0
        %v375 = vpop.f32.mrb[0].mxu0
        %v376 = vadd.f32 %v283, %v375
        %v377 = vpop.f32.mrb[0].mxu0
        %378 = vdwg.mxu0
        %v379 = vmax.f32 %v373, 0.0
        %v380 = vmax.f32 %v376, 0.0
        %v381 = vpack.c.bf16 %v380, %v379
        %v382 = vld [vmem:[#allocation7] sm:$0xff]
        %v383 = vld [vmem:[#allocation7 + $0x8] sm:$0xff]
        %v384 = vld [vmem:[#allocation7 + $0x10] sm:$0xff]
        %v385 = vld [vmem:[#allocation7 + $0x18] sm:$0xff]
        %v386 = vld [vmem:[#allocation7 + $0x20] sm:$0xff]
        %v387 = vld [vmem:[#allocation7 + $0x28] sm:$0xff]
        %v388 = vld [vmem:[#allocation7 + $0x30] sm:$0xff]
        %v389 = vld [vmem:[#allocation7 + $0x38] sm:$0xff]
        %v390 = vld [vmem:[#allocation7 + $0x40] sm:$0xff]
        %v391 = vld [vmem:[#allocation7 + $0x48] sm:$0xff]
        %v392 = vld [vmem:[#allocation7 + $0x50] sm:$0xff]
        %v393 = vld [vmem:[#allocation7 + $0x58] sm:$0xff]
        %v394 = vld [vmem:[#allocation7 + $0x60] sm:$0xff]
        %v395 = vld [vmem:[#allocation7 + $0x68] sm:$0xff]
        %v396 = vld [vmem:[#allocation7 + $0x70] sm:$0xff]
        %v397 = vld [vmem:[#allocation7 + $0x78] sm:$0xff]
        %s398 = scalar_lea.vmem [#allocation8], 1
        %v399 = vld [vmem:[%s398] ss:$2 sm:$0x3]
        %v401 = vlaneseq
        %v402 = vshrl.u32 %v401, 7
        %v403 = vsub.s32 0, %v402
        %v404 = vrot.slane %v399, %v403
        %v405 = vlaneseq
        %v406 = vshrl.u32 %v405, 7
        %v407 = vsub.s32 1, %v406
        %v408 = vrot.slane %v399, %v407
        %v427 = vunpack.c.l.b16 %v382
        %v428 = vunpack.c.h.b16 %v382
        %v429 = vunpack.c.l.b16 %v383
        %v430 = vunpack.c.h.b16 %v383
        %v431 = vunpack.c.l.b16 %v384
        %v432 = vunpack.c.h.b16 %v384
        %v433 = vunpack.c.l.b16 %v385
        %v434 = vunpack.c.h.b16 %v385
        %v435 = vunpack.c.l.b16 %v386
        %v436 = vunpack.c.h.b16 %v386
        %v437 = vunpack.c.l.b16 %v387
        %v438 = vunpack.c.h.b16 %v387
        %v439 = vunpack.c.l.b16 %v388
        %v440 = vunpack.c.h.b16 %v388
        %v441 = vunpack.c.l.b16 %v389
        %v442 = vunpack.c.h.b16 %v389
        %v443 = vunpack.c.l.b16 %v390
        %v444 = vunpack.c.h.b16 %v390
        %v445 = vunpack.c.l.b16 %v391
        %v446 = vunpack.c.h.b16 %v391
        %v447 = vunpack.c.l.b16 %v392
        %v448 = vunpack.c.h.b16 %v392
        %v449 = vunpack.c.l.b16 %v393
        %v450 = vunpack.c.h.b16 %v393
        %v451 = vunpack.c.l.b16 %v394
        %v452 = vunpack.c.h.b16 %v394
        %v453 = vunpack.c.l.b16 %v395
        %v454 = vunpack.c.h.b16 %v395
        %v455 = vunpack.c.l.b16 %v396
        %v456 = vunpack.c.h.b16 %v396
        %v457 = vunpack.c.l.b16 %v397
        %v458 = vunpack.c.h.b16 %v397
        %v459 = vpack.c.b16 %v429, %v427
        %v460 = vpack.c.b16 %v430, %v428
        %v461 = vpack.c.b16 %v433, %v431
        %v462 = vpack.c.b16 %v434, %v432
        %v463 = vpack.c.b16 %v437, %v435
        %v464 = vpack.c.b16 %v438, %v436
        %v465 = vpack.c.b16 %v441, %v439
        %v466 = vpack.c.b16 %v442, %v440
        %v467 = vpack.c.b16 %v445, %v443
        %v468 = vpack.c.b16 %v446, %v444
        %v469 = vpack.c.b16 %v449, %v447
        %v470 = vpack.c.b16 %v450, %v448
        %v471 = vpack.c.b16 %v453, %v451
        %v472 = vpack.c.b16 %v454, %v452
        %v473 = vpack.c.b16 %v457, %v455
        %v474 = vpack.c.b16 %v458, %v456
        %491 = vmatprep.subr.bf16.mxu0 %v460
        %492 = vmatpush1.bf16.msra.mxu0 %v459
        %493 = vmatprep.subr.bf16.mxu0 %v462
        %494 = vmatpush1.bf16.msra.mxu0 %v461
        %495 = vmatprep.subr.bf16.mxu0 %v464
        %496 = vmatpush1.bf16.msra.mxu0 %v463
        %497 = vmatprep.subr.bf16.mxu0 %v466
        %498 = vmatpush1.bf16.msra.mxu0 %v465
        %499 = vmatprep.subr.bf16.mxu0 %v468
        %500 = vmatpush1.bf16.msra.mxu0 %v467
        %501 = vmatprep.subr.bf16.mxu0 %v470
        %502 = vmatpush1.bf16.msra.mxu0 %v469
        %503 = vmatprep.subr.bf16.mxu0 %v472
        %504 = vmatpush1.bf16.msra.mxu0 %v471
        %505 = vmatprep.subr.bf16.mxu0 %v474
        %506 = vmatpush1.bf16.msra.mxu0 %v473
        %507 = vmatprep.subr.bf16.mxu0 0
        %508 = vmatpush1.bf16.msra.mxu0 0
        %509 = vmatprep.subr.bf16.mxu0 0
        %510 = vmatpush1.bf16.msra.mxu0 0
        %511 = vmatprep.subr.bf16.mxu0 0
        %512 = vmatpush1.bf16.msra.mxu0 0
        %513 = vmatprep.subr.bf16.mxu0 0
        %514 = vmatpush1.bf16.msra.mxu0 0
        %515 = vmatprep.subr.bf16.mxu0 0
        %516 = vmatpush1.bf16.msra.mxu0 0
        %517 = vmatprep.subr.bf16.mxu0 0
        %518 = vmatpush1.bf16.msra.mxu0 0
        %519 = vmatprep.subr.bf16.mxu0 0
        %520 = vmatpush1.bf16.msra.mxu0 0
        %521 = vmatprep.subr.bf16.mxu0 0
        %522 = vmatpush1.bf16.msra.mxu0 0
        %523 = vmatprep.mubr.bf16.mxu0 0
        %524 = vmatmul.mubr.bf16.gmra.mrb[0].mxu0 %v381
        %v525 = vpop.f32.mrb[0].mxu0
        %v526 = vadd.f32 %v404, %v525
        %v527 = vpop.f32.mrb[0].mxu0
        %v528 = vadd.f32 %v408, %v527
        %v529 = vpop.f32.mrb[0].mxu0
        %v530 = vadd.f32 %v404, %v529
        %v531 = vpop.f32.mrb[0].mxu0
        %v532 = vadd.f32 %v408, %v531
        %533 = vdwg.mxu0
        %v534 = vpack.c.bf16 %v530, %v526
        %v535 = vpack.c.bf16 %v532, %v528
        %v538 = vunpack.c.l.b16 %v534
        %v539 = vunpack.c.l.b16 %v535
        %v540 = vunpack.c.h.b16 %v534
        %v541 = vunpack.c.h.b16 %v535
        %v542 = vpack.c.b16 %v539, %v538
        %v543 = vpack.c.b16 %v541, %v540
        %546 = vst [vmem:[%s257] sm:$0xff] %v542
        %547 = vst [vmem:[%s257 + $0x8] sm:$0xff] %v543
        %s548 = sand.u32 %s120, 1
        %s549 = scalar_lea.sflag [#allocation4], %s548
        %s550 = sand.u32 %s120, 1
        %s551 = smul.addr %s550, 16
        %s552 = scalar_lea.vmem [#allocation10], %s551
        // Predicated region
        $region53: #{_fwd.1} parent=35 // pred_check
          %p553 = pneg %p130
        $region54: #{_fwd.1} parent=35 // pred_check_branch
          %555 = sbr.rel (%p553) target = $region56
        $region55: #{_fwd.1} parent=35 // pred_region
          %s556 = smul.u32 2, %s23
          %s558 = ssub.s32 256, 256
          %559 = vsyncadd %s549, %s558
          %s560 = smul.addr %s556, 2
          %s561 = smul.addr %s560, 64
          %s562 = scalar_lea.hbm %s4, %s561
          %s563 = sshll.u32 %s552, 4
          %s564 = int_to_ptr.vmem [resolvable:$true] %s563
          %569 = dma.vmem_to_hbm [thread:$0]  %s564, 256, %s562, %s549, 128, 128, 8
        $region56: #{_fwd.1} parent=35 // pred_fallthru
          _
      $region36: #{_fwd.1} parent=5 // pred_fallthru
        _
      %p570 = scmp.le.s32.totalorder 2, %s18
      // Predicated region
      $region57: #{_fwd.1} parent=5 // pred_check
        %p571 = pneg %p570
      $region58: #{_fwd.1} parent=5 // pred_check_branch
        %573 = sbr.rel (%p571) target = $region60
      $region59: #{_fwd.1} parent=5 // pred_region
        %s574 = ssub.s32 %s18, 2
        // Predicated region
        $region61: #{_fwd.1} parent=59 // pred_check
          %p575 = pneg %p136
        $region62: #{_fwd.1} parent=59 // pred_check_branch
          %577 = sbr.rel (%p575) target = $region64
        $region63: #{_fwd.1} parent=59 // pred_region
          %s578 = sand.u32 %s121, 1
          %s579 = scalar_lea.sflag [#allocation4], %s578
          %s580 = sand.u32 %s121, 1
          %s581 = smul.addr %s580, 16
          %s582 = scalar_lea.vmem [#allocation10], %s581
          %583 = dma.done %s579, 256
        $region64: #{_fwd.1} parent=59 // pred_fallthru
          _
      $region60: #{_fwd.1} parent=5 // pred_fallthru
        _
    $region6: #{_fwd.1} parent=1 // loop_footer
      %s22 = sadd.s32 1, %s18
    $region7: #{_fwd.1} parent=1 // loop_footer_branch
      %17 = sbr.rel target = $region3
    $region8: #{_fwd.1} parent=1 // loop_exit
      _
    %584 = vsyncpa [#allocation3], 1
    %s585 = scalar_lea.sflag [#allocation3], 1
    %586 = vsyncpa %s585, 1
    %587 = vsyncpa [#allocation6], 1
    %588 = vsyncpa [#allocation9], 1
    %589 = vsyncpa [#allocation4], 1
    %s590 = scalar_lea.sflag [#allocation4], 1
    %591 = vsyncpa %s590, 1

</llo_original>
